<compile_context>
chip_gen: v7x
topology: tpu7x:2x2x1
jax: 0.10.0
libtpu: 0.0.40
codegen_flags: <defaults>
</compile_context>

<pallas_src>
import jax
import jax.numpy as jnp
from jax.experimental import pallas as pl
from jax.experimental.pallas import tpu as pltpu

IN_DIM = 28 * 28
H1 = 64
H2 = 64
H3 = 64
CLASSES = 10

# Per-tile VMEM (bf16 x tile, double-buffered) stays well under the 16 MiB
# v5e scoped default and v7x's 64 MiB physical VMEM at this size. Raise
# pltpu.CompilerParams(vmem_limit_bytes=...) if you grow it past ~4096.
DEFAULT_TILE_B = 1024


def _round_up(n: int, m: int) -> int:
    return ((n + m - 1) // m) * m


def mlp_kernel(x_ref, w1_ref, b1_ref, w2_ref, b2_ref, w3_ref, b3_ref,
               w4_ref, b4_ref, out_ref):
    # One batch tile per grid step: 4 fused matmuls + ReLUs + log_softmax.
    # bf16 MXU operands, f32 accumulation (preferred_element_type) and f32
    # pointwise math (v5e VPU/EUP have no bf16).
    x = x_ref[...]                                                  # (TB, 784) bf16

    h = jnp.dot(x, w1_ref[...], preferred_element_type=jnp.float32) + b1_ref[...]
    h = jnp.maximum(h, 0.0).astype(jnp.bfloat16)

    h = jnp.dot(h, w2_ref[...], preferred_element_type=jnp.float32) + b2_ref[...]
    h = jnp.maximum(h, 0.0).astype(jnp.bfloat16)

    h = jnp.dot(h, w3_ref[...], preferred_element_type=jnp.float32) + b3_ref[...]
    h = jnp.maximum(h, 0.0).astype(jnp.bfloat16)

    logits = jnp.dot(h, w4_ref[...], preferred_element_type=jnp.float32) + b4_ref[...]

    # Numerically stable log_softmax over the class axis (f32).
    m = jnp.max(logits, axis=-1, keepdims=True)
    shifted = logits - m
    lse = jnp.log(jnp.sum(jnp.exp(shifted), axis=-1, keepdims=True))
    out_ref[...] = (shifted - lse).astype(out_ref.dtype)


@jax.jit
def net_forward(x, params):
    w1, b1, w2, b2, w3, b3, w4, b4 = params
    B = x.shape[0]

    # Batch tile: multiple of 8 (sublane), capped at DEFAULT_TILE_B.
    tile_b = min(DEFAULT_TILE_B, _round_up(B, 8))
    padded_b = _round_up(B, tile_b)

    x = x.astype(jnp.bfloat16)
    if padded_b != B:
        x = jnp.pad(x, ((0, padded_b - B), (0, 0)))

    grid = (padded_b // tile_b,)

    def full_spec(shape):
        # Whole parameter as a single block, same block every grid step ->
        # DMA'd once, resident in VMEM across the batch loop.
        return pl.BlockSpec(shape, lambda i: (0, 0))

    flops = 2 * padded_b * (IN_DIM * H1 + H1 * H2 + H2 * H3 + H3 * CLASSES)
    param_bytes = sum(int(p.size) * p.dtype.itemsize for p in params)
    bytes_accessed = (padded_b * IN_DIM * 2          # bf16 x read
                      + padded_b * CLASSES * 4       # f32 output write
                      + param_bytes)

    out = pl.pallas_call(
        mlp_kernel,
        out_shape=jax.ShapeDtypeStruct((padded_b, CLASSES), jnp.float32),
        grid=grid,
        in_specs=[
            pl.BlockSpec((tile_b, IN_DIM), lambda i: (i, 0)),   # x: batch-tiled
            full_spec((IN_DIM, H1)), full_spec((1, H1)),
            full_spec((H1, H2)),     full_spec((1, H2)),
            full_spec((H2, H3)),     full_spec((1, H3)),
            full_spec((H3, CLASSES)), full_spec((1, CLASSES)),
        ],
        out_specs=pl.BlockSpec((tile_b, CLASSES), lambda i: (i, 0)),
        compiler_params=pltpu.CompilerParams(
            dimension_semantics=("parallel",)),          # shards grid over v7x's 2 TCs
        cost_estimate=pl.CostEstimate(
            flops=flops,
            transcendentals=padded_b * (CLASSES + 1),
            bytes_accessed=bytes_accessed),
    )(x, w1, b1, w2, b2, w3, b3, w4, b4)

    return out[:B]


def init_params(key):
    """Deterministic init mimicking PyTorch nn.Linear default (U[-1/sqrt(fan_in), +]).

    Weights stored as (in, out) bf16 so the kernel computes x @ W + b on the MXU;
    biases kept f32 (added after the f32-accumulated matmul).
    """
    dims = [(IN_DIM, H1), (H1, H2), (H2, H3), (H3, CLASSES)]
    params = []
    keys = jax.random.split(key, 2 * len(dims))
    for i, (fan_in, fan_out) in enumerate(dims):
        bound = 1.0 / (fan_in ** 0.5)
        w = jax.random.uniform(keys[2 * i], (fan_in, fan_out), jnp.float32,
                               minval=-bound, maxval=bound).astype(jnp.bfloat16)
        b = jax.random.uniform(keys[2 * i + 1], (1, fan_out), jnp.float32,
                               minval=-bound, maxval=bound)
        params.extend([w, b])
    return tuple(params)


if __name__ == "__main__":
    key = jax.random.PRNGKey(0)
    k_x, k_p = jax.random.split(key)
    batch = 8
    x = jax.random.normal(k_x, (batch, IN_DIM), jnp.float32)
    params = init_params(k_p)

    out = net_forward(x, params)
    out = jax.block_until_ready(out)

    assert out.shape == (batch, CLASSES), out.shape
    # log_softmax rows should exponentiate-and-sum to 1.
    row_sums = jnp.sum(jnp.exp(out), axis=1)
    assert jnp.allclose(row_sums, 1.0, atol=1e-4), row_sums

    print("KERNEL_OK")
</pallas_src>

<mosaic_0001>
module attributes {stable_mosaic.version = 11 : i64} {
  func.func @mlp_kernel(%arg0: i32, %arg1: memref<8x784xbf16, #tpu.memory_space<vmem>>, %arg2: memref<784x64xbf16, #tpu.memory_space<vmem>>, %arg3: memref<1x64xf32, #tpu.memory_space<vmem>>, %arg4: memref<64x64xbf16, #tpu.memory_space<vmem>>, %arg5: memref<1x64xf32, #tpu.memory_space<vmem>>, %arg6: memref<64x64xbf16, #tpu.memory_space<vmem>>, %arg7: memref<1x64xf32, #tpu.memory_space<vmem>>, %arg8: memref<64x10xbf16, #tpu.memory_space<vmem>>, %arg9: memref<1x10xf32, #tpu.memory_space<vmem>>, %arg10: memref<8x10xf32, #tpu.memory_space<vmem>>) attributes {dimension_semantics = [#tpu.dimension_semantics<parallel>], iteration_bounds = array<i64: 1>, scalar_prefetch = 0 : i64, scratch_operands = 0 : i64, tpu.core_type = #tpu.core_type<tc>, window_params = [{transform_indices = @transform_0, window_bounds = array<i64: 8, 784>}, {pipeline_mode = #tpu.pipeline_mode<synchronous>, transform_indices = @transform_1, window_bounds = array<i64: 784, 64>}, {pipeline_mode = #tpu.pipeline_mode<synchronous>, transform_indices = @transform_2, window_bounds = array<i64: 1, 64>}, {pipeline_mode = #tpu.pipeline_mode<synchronous>, transform_indices = @transform_3, window_bounds = array<i64: 64, 64>}, {pipeline_mode = #tpu.pipeline_mode<synchronous>, transform_indices = @transform_4, window_bounds = array<i64: 1, 64>}, {pipeline_mode = #tpu.pipeline_mode<synchronous>, transform_indices = @transform_5, window_bounds = array<i64: 64, 64>}, {pipeline_mode = #tpu.pipeline_mode<synchronous>, transform_indices = @transform_6, window_bounds = array<i64: 1, 64>}, {pipeline_mode = #tpu.pipeline_mode<synchronous>, transform_indices = @transform_7, window_bounds = array<i64: 64, 10>}, {pipeline_mode = #tpu.pipeline_mode<synchronous>, transform_indices = @transform_8, window_bounds = array<i64: 1, 10>}, {transform_indices = @transform_9, window_bounds = array<i64: 8, 10>}]} {
    %c0 = arith.constant 0 : index
    %c0_0 = arith.constant 0 : index
    %0 = vector.load %arg1[%c0, %c0_0] : memref<8x784xbf16, #tpu.memory_space<vmem>>, vector<8x784xbf16>
    %c0_1 = arith.constant 0 : index
    %c0_2 = arith.constant 0 : index
    %1 = vector.load %arg2[%c0_1, %c0_2] : memref<784x64xbf16, #tpu.memory_space<vmem>>, vector<784x64xbf16>
    %cst = arith.constant dense<0.000000e+00> : vector<8x64xf32>
    %2 = tpu.matmul %0, %1, %cst {dimension_numbers = #tpu.dot_dimension_numbers<[1], [0], [0], [1], [0, 0, 1, 1], [], []>} : vector<8x784xbf16>, vector<784x64xbf16>, vector<8x64xf32> -> vector<8x64xf32>
    %c0_3 = arith.constant 0 : index
    %c0_4 = arith.constant 0 : index
    %3 = vector.load %arg3[%c0_3, %c0_4] : memref<1x64xf32, #tpu.memory_space<vmem>>, vector<1x64xf32>
    %4 = vector.broadcast %3 : vector<1x64xf32> to vector<8x64xf32>
    %5 = arith.addf %2, %4 : vector<8x64xf32>
    %cst_5 = arith.constant 0.000000e+00 : f32
    %6 = vector.broadcast %cst_5 : f32 to vector<8x64xf32>
    %7 = arith.maximumf %5, %6 : vector<8x64xf32>
    %8 = arith.truncf %7 : vector<8x64xf32> to vector<8x64xbf16>
    %c0_6 = arith.constant 0 : index
    %c0_7 = arith.constant 0 : index
    %9 = vector.load %arg4[%c0_6, %c0_7] : memref<64x64xbf16, #tpu.memory_space<vmem>>, vector<64x64xbf16>
    %cst_8 = arith.constant dense<0.000000e+00> : vector<8x64xf32>
    %10 = tpu.matmul %8, %9, %cst_8 {dimension_numbers = #tpu.dot_dimension_numbers<[1], [0], [0], [1], [0, 0, 1, 1], [], []>} : vector<8x64xbf16>, vector<64x64xbf16>, vector<8x64xf32> -> vector<8x64xf32>
    %c0_9 = arith.constant 0 : index
    %c0_10 = arith.constant 0 : index
    %11 = vector.load %arg5[%c0_9, %c0_10] : memref<1x64xf32, #tpu.memory_space<vmem>>, vector<1x64xf32>
    %12 = vector.broadcast %11 : vector<1x64xf32> to vector<8x64xf32>
    %13 = arith.addf %10, %12 : vector<8x64xf32>
    %cst_11 = arith.constant 0.000000e+00 : f32
    %14 = vector.broadcast %cst_11 : f32 to vector<8x64xf32>
    %15 = arith.maximumf %13, %14 : vector<8x64xf32>
    %16 = arith.truncf %15 : vector<8x64xf32> to vector<8x64xbf16>
    %c0_12 = arith.constant 0 : index
    %c0_13 = arith.constant 0 : index
    %17 = vector.load %arg6[%c0_12, %c0_13] : memref<64x64xbf16, #tpu.memory_space<vmem>>, vector<64x64xbf16>
    %cst_14 = arith.constant dense<0.000000e+00> : vector<8x64xf32>
    %18 = tpu.matmul %16, %17, %cst_14 {dimension_numbers = #tpu.dot_dimension_numbers<[1], [0], [0], [1], [0, 0, 1, 1], [], []>} : vector<8x64xbf16>, vector<64x64xbf16>, vector<8x64xf32> -> vector<8x64xf32>
    %c0_15 = arith.constant 0 : index
    %c0_16 = arith.constant 0 : index
    %19 = vector.load %arg7[%c0_15, %c0_16] : memref<1x64xf32, #tpu.memory_space<vmem>>, vector<1x64xf32>
    %20 = vector.broadcast %19 : vector<1x64xf32> to vector<8x64xf32>
    %21 = arith.addf %18, %20 : vector<8x64xf32>
    %cst_17 = arith.constant 0.000000e+00 : f32
    %22 = vector.broadcast %cst_17 : f32 to vector<8x64xf32>
    %23 = arith.maximumf %21, %22 : vector<8x64xf32>
    %24 = arith.truncf %23 : vector<8x64xf32> to vector<8x64xbf16>
    %c0_18 = arith.constant 0 : index
    %c0_19 = arith.constant 0 : index
    %25 = vector.load %arg8[%c0_18, %c0_19] : memref<64x10xbf16, #tpu.memory_space<vmem>>, vector<64x10xbf16>
    %cst_20 = arith.constant dense<0.000000e+00> : vector<8x10xf32>
    %26 = tpu.matmul %24, %25, %cst_20 {dimension_numbers = #tpu.dot_dimension_numbers<[1], [0], [0], [1], [0, 0, 1, 1], [], []>} : vector<8x64xbf16>, vector<64x10xbf16>, vector<8x10xf32> -> vector<8x10xf32>
    %c0_21 = arith.constant 0 : index
    %c0_22 = arith.constant 0 : index
    %27 = vector.load %arg9[%c0_21, %c0_22] : memref<1x10xf32, #tpu.memory_space<vmem>>, vector<1x10xf32>
    %28 = vector.broadcast %27 : vector<1x10xf32> to vector<8x10xf32>
    %29 = arith.addf %26, %28 : vector<8x10xf32>
    %cst_23 = arith.constant dense<0xFF800000> : vector<8xf32>
    %30 = vector.multi_reduction <maximumf>, %29, %cst_23 [1] : vector<8x10xf32> to vector<8xf32>
    %31 = vector.shape_cast %30 : vector<8xf32> to vector<8x1xf32>
    %32 = vector.broadcast %31 : vector<8x1xf32> to vector<8x10xf32>
    %33 = arith.subf %29, %32 : vector<8x10xf32>
    %34 = math.exp %33 : vector<8x10xf32>
    %cst_24 = arith.constant dense<0.000000e+00> : vector<8xf32>
    %35 = vector.multi_reduction <add>, %34, %cst_24 [1] : vector<8x10xf32> to vector<8xf32>
    %36 = vector.shape_cast %35 : vector<8xf32> to vector<8x1xf32>
    %37 = math.log %36 : vector<8x1xf32>
    %38 = vector.broadcast %37 : vector<8x1xf32> to vector<8x10xf32>
    %39 = arith.subf %33, %38 : vector<8x10xf32>
    %c0_25 = arith.constant 0 : index
    %c0_26 = arith.constant 0 : index
    %40 = vector.load %arg10[%c0_25, %c0_26] : memref<8x10xf32, #tpu.memory_space<vmem>>, vector<8x10xf32>
    tpu.vector_store %arg10[%c0_25, %c0_26], %39 {strides = array<i32>} : memref<8x10xf32, #tpu.memory_space<vmem>>, vector<8x10xf32>,
    return
  }
  func.func @transform_0(%arg0: i32) -> (i32, i32) {
    %c0_i32 = arith.constant 0 : i32
    %c0_i32_0 = arith.constant 0 : i32
    return %arg0, %c0_i32 : i32, i32
  }
  func.func @transform_1(%arg0: i32) -> (i32, i32) {
    %c0_i32 = arith.constant 0 : i32
    %c0_i32_0 = arith.constant 0 : i32
    %c0_i32_1 = arith.constant 0 : i32
    return %c0_i32, %c0_i32_0 : i32, i32
  }
  func.func @transform_2(%arg0: i32) -> (i32, i32) {
    %c0_i32 = arith.constant 0 : i32
    %c0_i32_0 = arith.constant 0 : i32
    %c0_i32_1 = arith.constant 0 : i32
    return %c0_i32, %c0_i32_0 : i32, i32
  }
  func.func @transform_3(%arg0: i32) -> (i32, i32) {
    %c0_i32 = arith.constant 0 : i32
    %c0_i32_0 = arith.constant 0 : i32
    %c0_i32_1 = arith.constant 0 : i32
    return %c0_i32, %c0_i32_0 : i32, i32
  }
  func.func @transform_4(%arg0: i32) -> (i32, i32) {
    %c0_i32 = arith.constant 0 : i32
    %c0_i32_0 = arith.constant 0 : i32
    %c0_i32_1 = arith.constant 0 : i32
    return %c0_i32, %c0_i32_0 : i32, i32
  }
  func.func @transform_5(%arg0: i32) -> (i32, i32) {
    %c0_i32 = arith.constant 0 : i32
    %c0_i32_0 = arith.constant 0 : i32
    %c0_i32_1 = arith.constant 0 : i32
    return %c0_i32, %c0_i32_0 : i32, i32
  }
  func.func @transform_6(%arg0: i32) -> (i32, i32) {
    %c0_i32 = arith.constant 0 : i32
    %c0_i32_0 = arith.constant 0 : i32
    %c0_i32_1 = arith.constant 0 : i32
    return %c0_i32, %c0_i32_0 : i32, i32
  }
  func.func @transform_7(%arg0: i32) -> (i32, i32) {
    %c0_i32 = arith.constant 0 : i32
    %c0_i32_0 = arith.constant 0 : i32
    %c0_i32_1 = arith.constant 0 : i32
    return %c0_i32, %c0_i32_0 : i32, i32
  }
  func.func @transform_8(%arg0: i32) -> (i32, i32) {
    %c0_i32 = arith.constant 0 : i32
    %c0_i32_0 = arith.constant 0 : i32
    %c0_i32_1 = arith.constant 0 : i32
    return %c0_i32, %c0_i32_0 : i32, i32
  }
  func.func @transform_9(%arg0: i32) -> (i32, i32) {
    %c0_i32 = arith.constant 0 : i32
    %c0_i32_0 = arith.constant 0 : i32
    return %arg0, %c0_i32 : i32, i32
  }
}

</mosaic_0001>

<llo_original>
// kernel: net_forward.1
$region0: #{net_forward.1}
  #allocation0 [shape = 'u32[]', space=smem, size = 0x4, offset = 0x4, fixed_abs, tag = 'smem constant byte address 0x4 - core index']
  #allocation1 [shape = 'u32[144,128]{1,0:T(1,128)}', space=vmem, size = 0x12000, scoped, tag = 'internal scratch']
  %s0 = inlined_call_operand.vmem [shape: bf16[8,784], index: 0, kind: input, shape index: {}]
  %s1 = inlined_call_operand.vmem [shape: bf16[784,64], index: 1, kind: input, shape index: {}]
  %s2 = inlined_call_operand.vmem [shape: f32[1,64], index: 2, kind: input, shape index: {}]
  %s3 = inlined_call_operand.vmem [shape: bf16[64,64], index: 3, kind: input, shape index: {}]
  %s4 = inlined_call_operand.vmem [shape: f32[1,64], index: 4, kind: input, shape index: {}]
  %s5 = inlined_call_operand.vmem [shape: bf16[64,64], index: 5, kind: input, shape index: {}]
  %s6 = inlined_call_operand.vmem [shape: f32[1,64], index: 6, kind: input, shape index: {}]
  %s7 = inlined_call_operand.vmem [shape: bf16[64,10], index: 7, kind: input, shape index: {}]
  %s8 = inlined_call_operand.vmem [shape: f32[1,10], index: 8, kind: input, shape index: {}]
  %s9 = inlined_call_operand.hbm [shape: f32[8,10], index: 9, kind: output, shape index: {}]
  %s10 = sld [smem:[#allocation0]]
  $region46: #{net_forward.1} parent=0
    _
  %s12 = ssub.s32 1, %s10
  %s13 = scalar_select 0, %s12, %s10
  $region1: #{net_forward.1} parent=0
    #allocation2 [shape = 'u8[4096]{0}', space=vmem, size = 0x1000, scoped, tag = 'output window, operand 0, single buffered']
    #allocation3 [shape = 's32[1]{0}', space=sflag, size = 0x4, scoped, tag = 'scoped memory for net_forward.1']
    %14 = vsyncpa [#allocation3], 0
    // Predicated region
    $region2: #{net_forward.1} parent=1 // pred_check
      _
    $region3: #{net_forward.1} parent=1 // pred_check_branch
      %16 = sbr.rel (0) target = $region5
    $region4: #{net_forward.1} parent=1 // pred_region
      _
    $region5: #{net_forward.1} parent=1 // pred_fallthru
      _
    // Predicated region
    $region6: #{net_forward.1} parent=1 // pred_check
      _
    $region7: #{net_forward.1} parent=1 // pred_check_branch
      %18 = sbr.rel (0) target = $region9
    $region8: #{net_forward.1} parent=1 // pred_region
      _
    $region9: #{net_forward.1} parent=1 // pred_fallthru
      _
    // Predicated region
    $region10: #{net_forward.1} parent=1 // pred_check
      _
    $region11: #{net_forward.1} parent=1 // pred_check_branch
      %20 = sbr.rel (0) target = $region13
    $region12: #{net_forward.1} parent=1 // pred_region
      _
    $region13: #{net_forward.1} parent=1 // pred_fallthru
      _
    // Predicated region
    $region14: #{net_forward.1} parent=1 // pred_check
      _
    $region15: #{net_forward.1} parent=1 // pred_check_branch
      %22 = sbr.rel (0) target = $region17
    $region16: #{net_forward.1} parent=1 // pred_region
      _
    $region17: #{net_forward.1} parent=1 // pred_fallthru
      _
    // Predicated region
    $region18: #{net_forward.1} parent=1 // pred_check
      _
    $region19: #{net_forward.1} parent=1 // pred_check_branch
      %24 = sbr.rel (0) target = $region21
    $region20: #{net_forward.1} parent=1 // pred_region
      _
    $region21: #{net_forward.1} parent=1 // pred_fallthru
      _
    // Predicated region
    $region22: #{net_forward.1} parent=1 // pred_check
      _
    $region23: #{net_forward.1} parent=1 // pred_check_branch
      %26 = sbr.rel (0) target = $region25
    $region24: #{net_forward.1} parent=1 // pred_region
      _
    $region25: #{net_forward.1} parent=1 // pred_fallthru
      _
    // Predicated region
    $region26: #{net_forward.1} parent=1 // pred_check
      _
    $region27: #{net_forward.1} parent=1 // pred_check_branch
      %28 = sbr.rel (0) target = $region29
    $region28: #{net_forward.1} parent=1 // pred_region
      _
    $region29: #{net_forward.1} parent=1 // pred_fallthru
      _
    // Predicated region
    $region30: #{net_forward.1} parent=1 // pred_check
      _
    $region31: #{net_forward.1} parent=1 // pred_check_branch
      %30 = sbr.rel (0) target = $region33
    $region32: #{net_forward.1} parent=1 // pred_region
      _
    $region33: #{net_forward.1} parent=1 // pred_fallthru
      _
    // Predicated region
    $region34: #{net_forward.1} parent=1 // pred_check
      _
    $region35: #{net_forward.1} parent=1 // pred_check_branch
      %32 = sbr.rel (0) target = $region37
    $region36: #{net_forward.1} parent=1 // pred_region
      _
    $region37: #{net_forward.1} parent=1 // pred_fallthru
      _
    %v34 = vld [vmem:[%s0] sm:$0xff]
    %v35 = vld [vmem:[%s0 + $0x8] sm:$0xff]
    %v36 = vld [vmem:[%s0 + $0x10] sm:$0xff]
    %v37 = vld [vmem:[%s0 + $0x18] sm:$0xf]
    %v38 = vld [vmem:[%s1] sm:$0xf]
    %v39 = vld [vmem:[%s1 + $0x4] sm:$0xf]
    %v40 = vld [vmem:[%s1 + $0x8] sm:$0xf]
    %v41 = vld [vmem:[%s1 + $0xc] sm:$0xf]
    %v42 = vld [vmem:[%s1 + $0x10] sm:$0xf]
    %v43 = vld [vmem:[%s1 + $0x14] sm:$0xf]
    %v44 = vld [vmem:[%s1 + $0x18] sm:$0xf]
    %v45 = vld [vmem:[%s1 + $0x1c] sm:$0xf]
    %v46 = vld [vmem:[%s1 + $0x20] sm:$0xf]
    %v47 = vld [vmem:[%s1 + $0x24] sm:$0xf]
    %v48 = vld [vmem:[%s1 + $0x28] sm:$0xf]
    %v49 = vld [vmem:[%s1 + $0x2c] sm:$0xf]
    %v50 = vld [vmem:[%s1 + $0x30] sm:$0xf]
    %v51 = vld [vmem:[%s1 + $0x34] sm:$0xf]
    %v52 = vld [vmem:[%s1 + $0x38] sm:$0xf]
    %v53 = vld [vmem:[%s1 + $0x3c] sm:$0xf]
    %v54 = vld [vmem:[%s1 + $0x40] sm:$0xf]
    %v55 = vld [vmem:[%s1 + $0x44] sm:$0xf]
    %v56 = vld [vmem:[%s1 + $0x48] sm:$0xf]
    %v57 = vld [vmem:[%s1 + $0x4c] sm:$0xf]
    %v58 = vld [vmem:[%s1 + $0x50] sm:$0xf]
    %v59 = vld [vmem:[%s1 + $0x54] sm:$0xf]
    %v60 = vld [vmem:[%s1 + $0x58] sm:$0xf]
    %v61 = vld [vmem:[%s1 + $0x5c] sm:$0xf]
    %v62 = vld [vmem:[%s1 + $0x60] sm:$0xf]
    %v63 = vld [vmem:[%s1 + $0x64] sm:$0xf]
    %v64 = vld [vmem:[%s1 + $0x68] sm:$0xf]
    %v65 = vld [vmem:[%s1 + $0x6c] sm:$0xf]
    %v66 = vld [vmem:[%s1 + $0x70] sm:$0xf]
    %v67 = vld [vmem:[%s1 + $0x74] sm:$0xf]
    %v68 = vld [vmem:[%s1 + $0x78] sm:$0xf]
    %v69 = vld [vmem:[%s1 + $0x7c] sm:$0xf]
    %v70 = vld [vmem:[%s1 + $0x80] sm:$0xf]
    %v71 = vld [vmem:[%s1 + $0x84] sm:$0xf]
    %v72 = vld [vmem:[%s1 + $0x88] sm:$0xf]
    %v73 = vld [vmem:[%s1 + $0x8c] sm:$0xf]
    %v74 = vld [vmem:[%s1 + $0x90] sm:$0xf]
    %v75 = vld [vmem:[%s1 + $0x94] sm:$0xf]
    %v76 = vld [vmem:[%s1 + $0x98] sm:$0xf]
    %v77 = vld [vmem:[%s1 + $0x9c] sm:$0xf]
    %v78 = vld [vmem:[%s1 + $0xa0] sm:$0xf]
    %v79 = vld [vmem:[%s1 + $0xa4] sm:$0xf]
    %v80 = vld [vmem:[%s1 + $0xa8] sm:$0xf]
    %v81 = vld [vmem:[%s1 + $0xac] sm:$0xf]
    %v82 = vld [vmem:[%s1 + $0xb0] sm:$0xf]
    %v83 = vld [vmem:[%s1 + $0xb4] sm:$0xf]
    %v84 = vld [vmem:[%s1 + $0xb8] sm:$0xf]
    %v85 = vld [vmem:[%s1 + $0xbc] sm:$0xf]
    %v86 = vld [vmem:[%s1 + $0xc0] sm:$0xf]
    %v87 = vld [vmem:[%s1 + $0xc4] sm:$0xf]
    %v88 = vld [vmem:[%s1 + $0xc8] sm:$0xf]
    %v89 = vld [vmem:[%s1 + $0xcc] sm:$0xf]
    %v90 = vld [vmem:[%s1 + $0xd0] sm:$0xf]
    %v91 = vld [vmem:[%s1 + $0xd4] sm:$0xf]
    %v92 = vld [vmem:[%s1 + $0xd8] sm:$0xf]
    %v93 = vld [vmem:[%s1 + $0xdc] sm:$0xf]
    %v94 = vld [vmem:[%s1 + $0xe0] sm:$0xf]
    %v95 = vld [vmem:[%s1 + $0xe4] sm:$0xf]
    %v96 = vld [vmem:[%s1 + $0xe8] sm:$0xf]
    %v97 = vld [vmem:[%s1 + $0xec] sm:$0xf]
    %v98 = vld [vmem:[%s1 + $0xf0] sm:$0xf]
    %v99 = vld [vmem:[%s1 + $0xf4] sm:$0xf]
    %v100 = vld [vmem:[%s1 + $0xf8] sm:$0xf]
    %v101 = vld [vmem:[%s1 + $0xfc] sm:$0xf]
    %v102 = vld [vmem:[%s1 + $0x100] sm:$0xf]
    %v103 = vld [vmem:[%s1 + $0x104] sm:$0xf]
    %v104 = vld [vmem:[%s1 + $0x108] sm:$0xf]
    %v105 = vld [vmem:[%s1 + $0x10c] sm:$0xf]
    %v106 = vld [vmem:[%s1 + $0x110] sm:$0xf]
    %v107 = vld [vmem:[%s1 + $0x114] sm:$0xf]
    %v108 = vld [vmem:[%s1 + $0x118] sm:$0xf]
    %v109 = vld [vmem:[%s1 + $0x11c] sm:$0xf]
    %v110 = vld [vmem:[%s1 + $0x120] sm:$0xf]
    %v111 = vld [vmem:[%s1 + $0x124] sm:$0xf]
    %v112 = vld [vmem:[%s1 + $0x128] sm:$0xf]
    %v113 = vld [vmem:[%s1 + $0x12c] sm:$0xf]
    %v114 = vld [vmem:[%s1 + $0x130] sm:$0xf]
    %v115 = vld [vmem:[%s1 + $0x134] sm:$0xf]
    %v116 = vld [vmem:[%s1 + $0x138] sm:$0xf]
    %v117 = vld [vmem:[%s1 + $0x13c] sm:$0xf]
    %v118 = vld [vmem:[%s1 + $0x140] sm:$0xf]
    %v119 = vld [vmem:[%s1 + $0x144] sm:$0xf]
    %v120 = vld [vmem:[%s1 + $0x148] sm:$0xf]
    %v121 = vld [vmem:[%s1 + $0x14c] sm:$0xf]
    %v122 = vld [vmem:[%s1 + $0x150] sm:$0xf]
    %v123 = vld [vmem:[%s1 + $0x154] sm:$0xf]
    %v124 = vld [vmem:[%s1 + $0x158] sm:$0xf]
    %v125 = vld [vmem:[%s1 + $0x15c] sm:$0xf]
    %v126 = vld [vmem:[%s1 + $0x160] sm:$0xf]
    %v127 = vld [vmem:[%s1 + $0x164] sm:$0xf]
    %v128 = vld [vmem:[%s1 + $0x168] sm:$0xf]
    %v129 = vld [vmem:[%s1 + $0x16c] sm:$0xf]
    %v130 = vld [vmem:[%s1 + $0x170] sm:$0xf]
    %v131 = vld [vmem:[%s1 + $0x174] sm:$0xf]
    %v132 = vld [vmem:[%s1 + $0x178] sm:$0xf]
    %v133 = vld [vmem:[%s1 + $0x17c] sm:$0xf]
    %v134 = vld [vmem:[%s1 + $0x180] sm:$0xf]
    %v135 = vld [vmem:[%s1 + $0x184] sm:$0xf]
    %v136 = vld [vmem:[%s2] sm:$0x1]
    %v138 = vlaneseq
    %v139 = vshrl.u32 %v138, 7
    %v140 = vsub.s32 0, %v139
    %v141 = vrot.slane %v136, %v140
    %v147 = vunpack.c.l.b16 %v34
    %v148 = vunpack.c.h.b16 %v34
    %v149 = vunpack.c.l.b16 %v35
    %v150 = vunpack.c.h.b16 %v35
    %v151 = vunpack.c.l.b16 %v36
    %v152 = vunpack.c.h.b16 %v36
    %v153 = vunpack.c.l.b16 %v37
    %v154 = vpack.c.b16 %v147, %v147
    %v155 = vpack.c.b16 %v148, %v148
    %v156 = vpack.c.b16 %v149, %v149
    %v157 = vpack.c.b16 %v150, %v150
    %v158 = vpack.c.b16 %v151, %v151
    %v159 = vpack.c.b16 %v152, %v152
    %v160 = vpack.c.b16 %v153, %v153
    %v265 = vunpack.c.l.b16 %v38
    %v266 = vunpack.c.l.b16 %v39
    %v267 = vunpack.c.l.b16 %v40
    %v268 = vunpack.c.l.b16 %v41
    %v269 = vunpack.c.l.b16 %v42
    %v270 = vunpack.c.l.b16 %v43
    %v271 = vunpack.c.l.b16 %v44
    %v272 = vunpack.c.l.b16 %v45
    %v273 = vunpack.c.l.b16 %v46
    %v274 = vunpack.c.l.b16 %v47
    %v275 = vunpack.c.l.b16 %v48
    %v276 = vunpack.c.l.b16 %v49
    %v277 = vunpack.c.l.b16 %v50
    %v278 = vunpack.c.l.b16 %v51
    %v279 = vunpack.c.l.b16 %v52
    %v280 = vunpack.c.l.b16 %v53
    %v281 = vunpack.c.l.b16 %v54
    %v282 = vunpack.c.l.b16 %v55
    %v283 = vunpack.c.l.b16 %v56
    %v284 = vunpack.c.l.b16 %v57
    %v285 = vunpack.c.l.b16 %v58
    %v286 = vunpack.c.l.b16 %v59
    %v287 = vunpack.c.l.b16 %v60
    %v288 = vunpack.c.l.b16 %v61
    %v289 = vunpack.c.l.b16 %v62
    %v290 = vunpack.c.l.b16 %v63
    %v291 = vunpack.c.l.b16 %v64
    %v292 = vunpack.c.l.b16 %v65
    %v293 = vunpack.c.l.b16 %v66
    %v294 = vunpack.c.l.b16 %v67
    %v295 = vunpack.c.l.b16 %v68
    %v296 = vunpack.c.l.b16 %v69
    %v297 = vunpack.c.l.b16 %v70
    %v298 = vunpack.c.l.b16 %v71
    %v299 = vunpack.c.l.b16 %v72
    %v300 = vunpack.c.l.b16 %v73
    %v301 = vunpack.c.l.b16 %v74
    %v302 = vunpack.c.l.b16 %v75
    %v303 = vunpack.c.l.b16 %v76
    %v304 = vunpack.c.l.b16 %v77
    %v305 = vunpack.c.l.b16 %v78
    %v306 = vunpack.c.l.b16 %v79
    %v307 = vunpack.c.l.b16 %v80
    %v308 = vunpack.c.l.b16 %v81
    %v309 = vunpack.c.l.b16 %v82
    %v310 = vunpack.c.l.b16 %v83
    %v311 = vunpack.c.l.b16 %v84
    %v312 = vunpack.c.l.b16 %v85
    %v313 = vunpack.c.l.b16 %v86
    %v314 = vunpack.c.l.b16 %v87
    %v315 = vunpack.c.l.b16 %v88
    %v316 = vunpack.c.l.b16 %v89
    %v317 = vunpack.c.l.b16 %v90
    %v318 = vunpack.c.l.b16 %v91
    %v319 = vunpack.c.l.b16 %v92
    %v320 = vunpack.c.l.b16 %v93
    %v321 = vunpack.c.l.b16 %v94
    %v322 = vunpack.c.l.b16 %v95
    %v323 = vunpack.c.l.b16 %v96
    %v324 = vunpack.c.l.b16 %v97
    %v325 = vunpack.c.l.b16 %v98
    %v326 = vunpack.c.l.b16 %v99
    %v327 = vunpack.c.l.b16 %v100
    %v328 = vunpack.c.l.b16 %v101
    %v329 = vunpack.c.l.b16 %v102
    %v330 = vunpack.c.l.b16 %v103
    %v331 = vunpack.c.l.b16 %v104
    %v332 = vunpack.c.l.b16 %v105
    %v333 = vunpack.c.l.b16 %v106
    %v334 = vunpack.c.l.b16 %v107
    %v335 = vunpack.c.l.b16 %v108
    %v336 = vunpack.c.l.b16 %v109
    %v337 = vunpack.c.l.b16 %v110
    %v338 = vunpack.c.l.b16 %v111
    %v339 = vunpack.c.l.b16 %v112
    %v340 = vunpack.c.l.b16 %v113
    %v341 = vunpack.c.l.b16 %v114
    %v342 = vunpack.c.l.b16 %v115
    %v343 = vunpack.c.l.b16 %v116
    %v344 = vunpack.c.l.b16 %v117
    %v345 = vunpack.c.l.b16 %v118
    %v346 = vunpack.c.l.b16 %v119
    %v347 = vunpack.c.l.b16 %v120
    %v348 = vunpack.c.l.b16 %v121
    %v349 = vunpack.c.l.b16 %v122
    %v350 = vunpack.c.l.b16 %v123
    %v351 = vunpack.c.l.b16 %v124
    %v352 = vunpack.c.l.b16 %v125
    %v353 = vunpack.c.l.b16 %v126
    %v354 = vunpack.c.l.b16 %v127
    %v355 = vunpack.c.l.b16 %v128
    %v356 = vunpack.c.l.b16 %v129
    %v357 = vunpack.c.l.b16 %v130
    %v358 = vunpack.c.l.b16 %v131
    %v359 = vunpack.c.l.b16 %v132
    %v360 = vunpack.c.l.b16 %v133
    %v361 = vunpack.c.l.b16 %v134
    %v362 = vunpack.c.l.b16 %v135
    %v363 = vpack.c.b16 %v266, %v265
    %v364 = vpack.c.b16 %v268, %v267
    %v365 = vpack.c.b16 %v270, %v269
    %v366 = vpack.c.b16 %v272, %v271
    %v367 = vpack.c.b16 %v274, %v273
    %v368 = vpack.c.b16 %v276, %v275
    %v369 = vpack.c.b16 %v278, %v277
    %v370 = vpack.c.b16 %v280, %v279
    %v371 = vpack.c.b16 %v282, %v281
    %v372 = vpack.c.b16 %v284, %v283
    %v373 = vpack.c.b16 %v286, %v285
    %v374 = vpack.c.b16 %v288, %v287
    %v375 = vpack.c.b16 %v290, %v289
    %v376 = vpack.c.b16 %v292, %v291
    %v377 = vpack.c.b16 %v294, %v293
    %v378 = vpack.c.b16 %v296, %v295
    %v379 = vpack.c.b16 %v298, %v297
    %v380 = vpack.c.b16 %v300, %v299
    %v381 = vpack.c.b16 %v302, %v301
    %v382 = vpack.c.b16 %v304, %v303
    %v383 = vpack.c.b16 %v306, %v305
    %v384 = vpack.c.b16 %v308, %v307
    %v385 = vpack.c.b16 %v310, %v309
    %v386 = vpack.c.b16 %v312, %v311
    %v387 = vpack.c.b16 %v314, %v313
    %v388 = vpack.c.b16 %v316, %v315
    %v389 = vpack.c.b16 %v318, %v317
    %v390 = vpack.c.b16 %v320, %v319
    %v391 = vpack.c.b16 %v322, %v321
    %v392 = vpack.c.b16 %v324, %v323
    %v393 = vpack.c.b16 %v326, %v325
    %v394 = vpack.c.b16 %v328, %v327
    %v395 = vpack.c.b16 %v330, %v329
    %v396 = vpack.c.b16 %v332, %v331
    %v397 = vpack.c.b16 %v334, %v333
    %v398 = vpack.c.b16 %v336, %v335
    %v399 = vpack.c.b16 %v338, %v337
    %v400 = vpack.c.b16 %v340, %v339
    %v401 = vpack.c.b16 %v342, %v341
    %v402 = vpack.c.b16 %v344, %v343
    %v403 = vpack.c.b16 %v346, %v345
    %v404 = vpack.c.b16 %v348, %v347
    %v405 = vpack.c.b16 %v350, %v349
    %v406 = vpack.c.b16 %v352, %v351
    %v407 = vpack.c.b16 %v354, %v353
    %v408 = vpack.c.b16 %v356, %v355
    %v409 = vpack.c.b16 %v358, %v357
    %v410 = vpack.c.b16 %v360, %v359
    %v411 = vpack.c.b16 %v362, %v361
    %vm461 = vcmask 130048
    %v463 = vsel %vm461, %v160, 0
    %465 = vmatprep.subr.bf16.mxu0 0
    %466 = vmatpush1.bf16.msra.mxu0 %v363
    %467 = vmatprep.subr.bf16.mxu0 0
    %468 = vmatpush1.bf16.msra.mxu0 %v364
    %469 = vmatprep.subr.bf16.mxu0 0
    %470 = vmatpush1.bf16.msra.mxu0 %v365
    %471 = vmatprep.subr.bf16.mxu0 0
    %472 = vmatpush1.bf16.msra.mxu0 %v366
    %473 = vmatprep.subr.bf16.mxu0 0
    %474 = vmatpush1.bf16.msra.mxu0 %v367
    %475 = vmatprep.subr.bf16.mxu0 0
    %476 = vmatpush1.bf16.msra.mxu0 %v368
    %477 = vmatprep.subr.bf16.mxu0 0
    %478 = vmatpush1.bf16.msra.mxu0 %v369
    %479 = vmatprep.subr.bf16.mxu0 0
    %480 = vmatpush1.bf16.msra.mxu0 %v370
    %481 = vmatprep.subr.bf16.mxu0 0
    %482 = vmatpush1.bf16.msra.mxu0 %v371
    %483 = vmatprep.subr.bf16.mxu0 0
    %484 = vmatpush1.bf16.msra.mxu0 %v372
    %485 = vmatprep.subr.bf16.mxu0 0
    %486 = vmatpush1.bf16.msra.mxu0 %v373
    %487 = vmatprep.subr.bf16.mxu0 0
    %488 = vmatpush1.bf16.msra.mxu0 %v374
    %489 = vmatprep.subr.bf16.mxu0 0
    %490 = vmatpush1.bf16.msra.mxu0 %v375
    %491 = vmatprep.subr.bf16.mxu0 0
    %492 = vmatpush1.bf16.msra.mxu0 %v376
    %493 = vmatprep.subr.bf16.mxu0 0
    %494 = vmatpush1.bf16.msra.mxu0 %v377
    %495 = vmatprep.subr.bf16.mxu0 0
    %496 = vmatpush1.bf16.msra.mxu0 %v378
    %497 = vmatprep.mubr.bf16.mxu0 %v155
    %498 = vmatmul.mubr.bf16.gmra.mrb[0].mxu0 %v154
    %v499 = vpop.f32.mrb[0].mxu0
    %v500 = vadd.f32 %v141, %v499
    %v501 = vpop.f32.mrb[0].mxu0
    %v502 = vpop.f32.mrb[0].mxu0
    %v503 = vpop.f32.mrb[0].mxu0
    %504 = vdwg.mxu0
    %505 = vmatprep.subr.bf16.mxu0 0
    %506 = vmatpush1.bf16.msra.mxu0 %v379
    %507 = vmatprep.subr.bf16.mxu0 0
    %508 = vmatpush1.bf16.msra.mxu0 %v380
    %509 = vmatprep.subr.bf16.mxu0 0
    %510 = vmatpush1.bf16.msra.mxu0 %v381
    %511 = vmatprep.subr.bf16.mxu0 0
    %512 = vmatpush1.bf16.msra.mxu0 %v382
    %513 = vmatprep.subr.bf16.mxu0 0
    %514 = vmatpush1.bf16.msra.mxu0 %v383
    %515 = vmatprep.subr.bf16.mxu0 0
    %516 = vmatpush1.bf16.msra.mxu0 %v384
    %517 = vmatprep.subr.bf16.mxu0 0
    %518 = vmatpush1.bf16.msra.mxu0 %v385
    %519 = vmatprep.subr.bf16.mxu0 0
    %520 = vmatpush1.bf16.msra.mxu0 %v386
    %521 = vmatprep.subr.bf16.mxu0 0
    %522 = vmatpush1.bf16.msra.mxu0 %v387
    %523 = vmatprep.subr.bf16.mxu0 0
    %524 = vmatpush1.bf16.msra.mxu0 %v388
    %525 = vmatprep.subr.bf16.mxu0 0
    %526 = vmatpush1.bf16.msra.mxu0 %v389
    %527 = vmatprep.subr.bf16.mxu0 0
    %528 = vmatpush1.bf16.msra.mxu0 %v390
    %529 = vmatprep.subr.bf16.mxu0 0
    %530 = vmatpush1.bf16.msra.mxu0 %v391
    %531 = vmatprep.subr.bf16.mxu0 0
    %532 = vmatpush1.bf16.msra.mxu0 %v392
    %533 = vmatprep.subr.bf16.mxu0 0
    %534 = vmatpush1.bf16.msra.mxu0 %v393
    %535 = vmatprep.subr.bf16.mxu0 0
    %536 = vmatpush1.bf16.msra.mxu0 %v394
    %537 = vmatprep.mubr.bf16.mxu0 %v157
    %538 = vmatmul.mubr.bf16.gmra.mrb[0].mxu0 %v156
    %v539 = vpop.f32.mrb[0].mxu0
    %v540 = vadd.f32 %v500, %v539
    %v541 = vpop.f32.mrb[0].mxu0
    %v542 = vpop.f32.mrb[0].mxu0
    %v543 = vpop.f32.mrb[0].mxu0
    %544 = vdwg.mxu0
    %545 = vmatprep.subr.bf16.mxu0 0
    %546 = vmatpush1.bf16.msra.mxu0 %v395
    %547 = vmatprep.subr.bf16.mxu0 0
    %548 = vmatpush1.bf16.msra.mxu0 %v396
    %549 = vmatprep.subr.bf16.mxu0 0
    %550 = vmatpush1.bf16.msra.mxu0 %v397
    %551 = vmatprep.subr.bf16.mxu0 0
    %552 = vmatpush1.bf16.msra.mxu0 %v398
    %553 = vmatprep.subr.bf16.mxu0 0
    %554 = vmatpush1.bf16.msra.mxu0 %v399
    %555 = vmatprep.subr.bf16.mxu0 0
    %556 = vmatpush1.bf16.msra.mxu0 %v400
    %557 = vmatprep.subr.bf16.mxu0 0
    %558 = vmatpush1.bf16.msra.mxu0 %v401
    %559 = vmatprep.subr.bf16.mxu0 0
    %560 = vmatpush1.bf16.msra.mxu0 %v402
    %561 = vmatprep.subr.bf16.mxu0 0
    %562 = vmatpush1.bf16.msra.mxu0 %v403
    %563 = vmatprep.subr.bf16.mxu0 0
    %564 = vmatpush1.bf16.msra.mxu0 %v404
    %565 = vmatprep.subr.bf16.mxu0 0
    %566 = vmatpush1.bf16.msra.mxu0 %v405
    %567 = vmatprep.subr.bf16.mxu0 0
    %568 = vmatpush1.bf16.msra.mxu0 %v406
    %569 = vmatprep.subr.bf16.mxu0 0
    %570 = vmatpush1.bf16.msra.mxu0 %v407
    %571 = vmatprep.subr.bf16.mxu0 0
    %572 = vmatpush1.bf16.msra.mxu0 %v408
    %573 = vmatprep.subr.bf16.mxu0 0
    %574 = vmatpush1.bf16.msra.mxu0 %v409
    %575 = vmatprep.subr.bf16.mxu0 0
    %576 = vmatpush1.bf16.msra.mxu0 %v410
    %577 = vmatprep.mubr.bf16.mxu0 %v159
    %578 = vmatmul.mubr.bf16.gmra.mrb[0].mxu0 %v158
    %v579 = vpop.f32.mrb[0].mxu0
    %v580 = vadd.f32 %v540, %v579
    %v581 = vpop.f32.mrb[0].mxu0
    %v582 = vpop.f32.mrb[0].mxu0
    %v583 = vpop.f32.mrb[0].mxu0
    %584 = vdwg.mxu0
    %585 = vmatprep.subr.bf16.mxu0 0
    %586 = vmatpush1.bf16.msra.mxu0 %v411
    %587 = vmatprep.subr.bf16.mxu0 0
    %588 = vmatpush1.bf16.msra.mxu0 0
    %589 = vmatprep.subr.bf16.mxu0 0
    %590 = vmatpush1.bf16.msra.mxu0 0
    %591 = vmatprep.subr.bf16.mxu0 0
    %592 = vmatpush1.bf16.msra.mxu0 0
    %593 = vmatprep.subr.bf16.mxu0 0
    %594 = vmatpush1.bf16.msra.mxu0 0
    %595 = vmatprep.subr.bf16.mxu0 0
    %596 = vmatpush1.bf16.msra.mxu0 0
    %597 = vmatprep.subr.bf16.mxu0 0
    %598 = vmatpush1.bf16.msra.mxu0 0
    %599 = vmatprep.subr.bf16.mxu0 0
    %600 = vmatpush1.bf16.msra.mxu0 0
    %601 = vmatprep.subr.bf16.mxu0 0
    %602 = vmatpush1.bf16.msra.mxu0 0
    %603 = vmatprep.subr.bf16.mxu0 0
    %604 = vmatpush1.bf16.msra.mxu0 0
    %605 = vmatprep.subr.bf16.mxu0 0
    %606 = vmatpush1.bf16.msra.mxu0 0
    %607 = vmatprep.subr.bf16.mxu0 0
    %608 = vmatpush1.bf16.msra.mxu0 0
    %609 = vmatprep.subr.bf16.mxu0 0
    %610 = vmatpush1.bf16.msra.mxu0 0
    %611 = vmatprep.subr.bf16.mxu0 0
    %612 = vmatpush1.bf16.msra.mxu0 0
    %613 = vmatprep.subr.bf16.mxu0 0
    %614 = vmatpush1.bf16.msra.mxu0 0
    %615 = vmatprep.subr.bf16.mxu0 0
    %616 = vmatpush1.bf16.msra.mxu0 0
    %617 = vmatprep.mubr.bf16.mxu0 0
    %618 = vmatmul.mubr.bf16.gmra.mrb[0].mxu0 %v463
    %v619 = vpop.f32.mrb[0].mxu0
    %v620 = vadd.f32 %v580, %v619
    %v621 = vpop.f32.mrb[0].mxu0
    %v622 = vpop.f32.mrb[0].mxu0
    %v623 = vpop.f32.mrb[0].mxu0
    %624 = vdwg.mxu0
    %v625 = vmax.f32 %v620, 0.0
    %v626 = vpack.c.bf16 %v625, %v625
    %v627 = vld [vmem:[%s3] sm:$0xf]
    %v628 = vld [vmem:[%s3 + $0x4] sm:$0xf]
    %v629 = vld [vmem:[%s3 + $0x8] sm:$0xf]
    %v630 = vld [vmem:[%s3 + $0xc] sm:$0xf]
    %v631 = vld [vmem:[%s3 + $0x10] sm:$0xf]
    %v632 = vld [vmem:[%s3 + $0x14] sm:$0xf]
    %v633 = vld [vmem:[%s3 + $0x18] sm:$0xf]
    %v634 = vld [vmem:[%s3 + $0x1c] sm:$0xf]
    %v635 = vld [vmem:[%s4] sm:$0x1]
    %v637 = vlaneseq
    %v638 = vshrl.u32 %v637, 7
    %v639 = vsub.s32 0, %v638
    %v640 = vrot.slane %v635, %v639
    %v650 = vunpack.c.l.b16 %v627
    %v651 = vunpack.c.l.b16 %v628
    %v652 = vunpack.c.l.b16 %v629
    %v653 = vunpack.c.l.b16 %v630
    %v654 = vunpack.c.l.b16 %v631
    %v655 = vunpack.c.l.b16 %v632
    %v656 = vunpack.c.l.b16 %v633
    %v657 = vunpack.c.l.b16 %v634
    %v658 = vpack.c.b16 %v651, %v650
    %v659 = vpack.c.b16 %v653, %v652
    %v660 = vpack.c.b16 %v655, %v654
    %v661 = vpack.c.b16 %v657, %v656
    %vm666 = vcmask 523264
    %v668 = vsel %vm666, %v626, 0
    %670 = vmatprep.subr.bf16.mxu0 0
    %671 = vmatpush1.bf16.msra.mxu0 %v658
    %672 = vmatprep.subr.bf16.mxu0 0
    %673 = vmatpush1.bf16.msra.mxu0 %v659
    %674 = vmatprep.subr.bf16.mxu0 0
    %675 = vmatpush1.bf16.msra.mxu0 %v660
    %676 = vmatprep.subr.bf16.mxu0 0
    %677 = vmatpush1.bf16.msra.mxu0 %v661
    %678 = vmatprep.subr.bf16.mxu0 0
    %679 = vmatpush1.bf16.msra.mxu0 0
    %680 = vmatprep.subr.bf16.mxu0 0
    %681 = vmatpush1.bf16.msra.mxu0 0
    %682 = vmatprep.subr.bf16.mxu0 0
    %683 = vmatpush1.bf16.msra.mxu0 0
    %684 = vmatprep.subr.bf16.mxu0 0
    %685 = vmatpush1.bf16.msra.mxu0 0
    %686 = vmatprep.subr.bf16.mxu0 0
    %687 = vmatpush1.bf16.msra.mxu0 0
    %688 = vmatprep.subr.bf16.mxu0 0
    %689 = vmatpush1.bf16.msra.mxu0 0
    %690 = vmatprep.subr.bf16.mxu0 0
    %691 = vmatpush1.bf16.msra.mxu0 0
    %692 = vmatprep.subr.bf16.mxu0 0
    %693 = vmatpush1.bf16.msra.mxu0 0
    %694 = vmatprep.subr.bf16.mxu0 0
    %695 = vmatpush1.bf16.msra.mxu0 0
    %696 = vmatprep.subr.bf16.mxu0 0
    %697 = vmatpush1.bf16.msra.mxu0 0
    %698 = vmatprep.subr.bf16.mxu0 0
    %699 = vmatpush1.bf16.msra.mxu0 0
    %700 = vmatprep.subr.bf16.mxu0 0
    %701 = vmatpush1.bf16.msra.mxu0 0
    %702 = vmatprep.mubr.bf16.mxu0 0
    %703 = vmatmul.mubr.bf16.gmra.mrb[0].mxu0 %v668
    %v704 = vpop.f32.mrb[0].mxu0
    %v705 = vadd.f32 %v640, %v704
    %v706 = vpop.f32.mrb[0].mxu0
    %v707 = vpop.f32.mrb[0].mxu0
    %v708 = vpop.f32.mrb[0].mxu0
    %709 = vdwg.mxu0
    %v710 = vmax.f32 %v705, 0.0
    %v711 = vpack.c.bf16 %v710, %v710
    %v712 = vld [vmem:[%s5] sm:$0xf]
    %v713 = vld [vmem:[%s5 + $0x4] sm:$0xf]
    %v714 = vld [vmem:[%s5 + $0x8] sm:$0xf]
    %v715 = vld [vmem:[%s5 + $0xc] sm:$0xf]
    %v716 = vld [vmem:[%s5 + $0x10] sm:$0xf]
    %v717 = vld [vmem:[%s5 + $0x14] sm:$0xf]
    %v718 = vld [vmem:[%s5 + $0x18] sm:$0xf]
    %v719 = vld [vmem:[%s5 + $0x1c] sm:$0xf]
    %v720 = vld [vmem:[%s6] sm:$0x1]
    %v722 = vlaneseq
    %v723 = vshrl.u32 %v722, 7
    %v724 = vsub.s32 0, %v723
    %v725 = vrot.slane %v720, %v724
    %v735 = vunpack.c.l.b16 %v712
    %v736 = vunpack.c.l.b16 %v713
    %v737 = vunpack.c.l.b16 %v714
    %v738 = vunpack.c.l.b16 %v715
    %v739 = vunpack.c.l.b16 %v716
    %v740 = vunpack.c.l.b16 %v717
    %v741 = vunpack.c.l.b16 %v718
    %v742 = vunpack.c.l.b16 %v719
    %v743 = vpack.c.b16 %v736, %v735
    %v744 = vpack.c.b16 %v738, %v737
    %v745 = vpack.c.b16 %v740, %v739
    %v746 = vpack.c.b16 %v742, %v741
    %v752 = vsel %vm666, %v711, 0
    %754 = vmatprep.subr.bf16.mxu0 0
    %755 = vmatpush1.bf16.msra.mxu0 %v743
    %756 = vmatprep.subr.bf16.mxu0 0
    %757 = vmatpush1.bf16.msra.mxu0 %v744
    %758 = vmatprep.subr.bf16.mxu0 0
    %759 = vmatpush1.bf16.msra.mxu0 %v745
    %760 = vmatprep.subr.bf16.mxu0 0
    %761 = vmatpush1.bf16.msra.mxu0 %v746
    %762 = vmatprep.subr.bf16.mxu0 0
    %763 = vmatpush1.bf16.msra.mxu0 0
    %764 = vmatprep.subr.bf16.mxu0 0
    %765 = vmatpush1.bf16.msra.mxu0 0
    %766 = vmatprep.subr.bf16.mxu0 0
    %767 = vmatpush1.bf16.msra.mxu0 0
    %768 = vmatprep.subr.bf16.mxu0 0
    %769 = vmatpush1.bf16.msra.mxu0 0
    %770 = vmatprep.subr.bf16.mxu0 0
    %771 = vmatpush1.bf16.msra.mxu0 0
    %772 = vmatprep.subr.bf16.mxu0 0
    %773 = vmatpush1.bf16.msra.mxu0 0
    %774 = vmatprep.subr.bf16.mxu0 0
    %775 = vmatpush1.bf16.msra.mxu0 0
    %776 = vmatprep.subr.bf16.mxu0 0
    %777 = vmatpush1.bf16.msra.mxu0 0
    %778 = vmatprep.subr.bf16.mxu0 0
    %779 = vmatpush1.bf16.msra.mxu0 0
    %780 = vmatprep.subr.bf16.mxu0 0
    %781 = vmatpush1.bf16.msra.mxu0 0
    %782 = vmatprep.subr.bf16.mxu0 0
    %783 = vmatpush1.bf16.msra.mxu0 0
    %784 = vmatprep.subr.bf16.mxu0 0
    %785 = vmatpush1.bf16.msra.mxu0 0
    %786 = vmatprep.mubr.bf16.mxu0 0
    %787 = vmatmul.mubr.bf16.gmra.mrb[0].mxu0 %v752
    %v788 = vpop.f32.mrb[0].mxu0
    %v789 = vadd.f32 %v725, %v788
    %v790 = vpop.f32.mrb[0].mxu0
    %v791 = vpop.f32.mrb[0].mxu0
    %v792 = vpop.f32.mrb[0].mxu0
    %793 = vdwg.mxu0
    %v794 = vmax.f32 %v789, 0.0
    %v795 = vpack.c.bf16 %v794, %v794
    %v796 = vld [vmem:[%s7] sm:$0xf]
    %v797 = vld [vmem:[%s7 + $0x4] sm:$0xf]
    %v798 = vld [vmem:[%s7 + $0x8] sm:$0xf]
    %v799 = vld [vmem:[%s7 + $0xc] sm:$0xf]
    %v800 = vld [vmem:[%s7 + $0x10] sm:$0xf]
    %v801 = vld [vmem:[%s7 + $0x14] sm:$0xf]
    %v802 = vld [vmem:[%s7 + $0x18] sm:$0xf]
    %v803 = vld [vmem:[%s7 + $0x1c] sm:$0xf]
    %v804 = vld [vmem:[%s8] sm:$0x1]
    %v806 = vlaneseq
    %v807 = vshrl.u32 %v806, 7
    %v808 = vsub.s32 0, %v807
    %v809 = vrot.slane %v804, %v808
    %v819 = vunpack.c.l.b16 %v796
    %v820 = vunpack.c.l.b16 %v797
    %v821 = vunpack.c.l.b16 %v798
    %v822 = vunpack.c.l.b16 %v799
    %v823 = vunpack.c.l.b16 %v800
    %v824 = vunpack.c.l.b16 %v801
    %v825 = vunpack.c.l.b16 %v802
    %v826 = vunpack.c.l.b16 %v803
    %v827 = vpack.c.b16 %v820, %v819
    %v828 = vpack.c.b16 %v822, %v821
    %v829 = vpack.c.b16 %v824, %v823
    %v830 = vpack.c.b16 %v826, %v825
    %v836 = vsel %vm666, %v795, 0
    %838 = vmatprep.subr.bf16.mxu0 0
    %839 = vmatpush1.bf16.msra.mxu0 %v827
    %840 = vmatprep.subr.bf16.mxu0 0
    %841 = vmatpush1.bf16.msra.mxu0 %v828
    %842 = vmatprep.subr.bf16.mxu0 0
    %843 = vmatpush1.bf16.msra.mxu0 %v829
    %844 = vmatprep.subr.bf16.mxu0 0
    %845 = vmatpush1.bf16.msra.mxu0 %v830
    %846 = vmatprep.subr.bf16.mxu0 0
    %847 = vmatpush1.bf16.msra.mxu0 0
    %848 = vmatprep.subr.bf16.mxu0 0
    %849 = vmatpush1.bf16.msra.mxu0 0
    %850 = vmatprep.subr.bf16.mxu0 0
    %851 = vmatpush1.bf16.msra.mxu0 0
    %852 = vmatprep.subr.bf16.mxu0 0
    %853 = vmatpush1.bf16.msra.mxu0 0
    %854 = vmatprep.subr.bf16.mxu0 0
    %855 = vmatpush1.bf16.msra.mxu0 0
    %856 = vmatprep.subr.bf16.mxu0 0
    %857 = vmatpush1.bf16.msra.mxu0 0
    %858 = vmatprep.subr.bf16.mxu0 0
    %859 = vmatpush1.bf16.msra.mxu0 0
    %860 = vmatprep.subr.bf16.mxu0 0
    %861 = vmatpush1.bf16.msra.mxu0 0
    %862 = vmatprep.subr.bf16.mxu0 0
    %863 = vmatpush1.bf16.msra.mxu0 0
    %864 = vmatprep.subr.bf16.mxu0 0
    %865 = vmatpush1.bf16.msra.mxu0 0
    %866 = vmatprep.subr.bf16.mxu0 0
    %867 = vmatpush1.bf16.msra.mxu0 0
    %868 = vmatprep.subr.bf16.mxu0 0
    %869 = vmatpush1.bf16.msra.mxu0 0
    %870 = vmatprep.mubr.bf16.mxu0 0
    %871 = vmatmul.mubr.bf16.gmra.mrb[0].mxu0 %v836
    %v872 = vpop.f32.mrb[0].mxu0
    %v873 = vadd.f32 %v809, %v872
    %v874 = vpop.f32.mrb[0].mxu0
    %v875 = vpop.f32.mrb[0].mxu0
    %v876 = vpop.f32.mrb[0].mxu0
    %877 = vdwg.mxu0
    %vm878 = vcmask 80896
    %v879 = vsel %vm878, %v873, -inf
    %880 = vmax.xlane.f32.xlu0 %v879
    %v881 = vpop.xlane.xlu0 %880
    %v882 = vsub.f32 %v873, %v881
    %v883 = vmul.f32 %v882, 1.442695
    %v884 = vpow.pop %v883
    %v885 = vsel %vm878, %v884, 0.0
    %886 = vadd.xlane.f32.xlu0 %v885
    %v887 = vpop.xlane.xlu0 %886
    %v888 = vlog2.pop %v887
    %v889 = vmul.f32 %v888, 0.6931472
    %v890 = vsub.f32 %v882, %v889
    %891 = vst.msk [vmem:[#allocation2] sm:$0xff] %vm878, %v890
    // Predicated region
    $region38: #{net_forward.1} parent=1 // pred_check
      _
    $region39: #{net_forward.1} parent=1 // pred_check_branch
      %893 = sbr.rel (0) target = $region41
    $region40: #{net_forward.1} parent=1 // pred_region
      %s895 = ssub.s32 128, 128
      %896 = vsyncadd [#allocation3], %s895
      %s898 = sshll.u32 [#allocation2], 4
      %s899 = int_to_ptr.vmem [resolvable:$true] %s898
      %901 = dma.vmem_to_hbm [thread:$0]  %s899, 128, %s9, [#allocation3]
    $region41: #{net_forward.1} parent=1 // pred_fallthru
      _
    // Predicated region
    $region42: #{net_forward.1} parent=1 // pred_check
      _
    $region43: #{net_forward.1} parent=1 // pred_check_branch
      %903 = sbr.rel (0) target = $region45
    $region44: #{net_forward.1} parent=1 // pred_region
      %904 = dma.done [#allocation3], 128
    $region45: #{net_forward.1} parent=1 // pred_fallthru
      _
    %905 = vsyncpa [#allocation3], 1

</llo_original>
